<compile_context>
chip_gen: v6e
topology: v6e:2x2x1
jax: 0.10.0
libtpu: 0.0.40
codegen_flags: <defaults>
</compile_context>

<pallas_src>
import jax
import jax.numpy as jnp
from jax import lax
from jax.experimental import pallas as pl
from jax.experimental.pallas import tpu as pltpu


# f32 pool compares: native on all gens (v5e has no bf16 VALU).  On v6e/v7x this can
# be flipped to jnp.bfloat16 to halve the padded-image VMEM scratch.
_POOL_DTYPE = jnp.float32


def _pool_head_kernel(x_ref, w12_ref, b12_ref, w3_ref, b3_ref, y_ref, pad_ref):
    """Fused MaxPool2d(3,2,1) + 1x1 convs + residual for one image.

    x_ref:   (1, H, W, Cin)        bf16 NHWC block for image n
    w12_ref: (Cin, 2*Cout)         bf16  [w1 | w2]
    b12_ref: (1, 2*Cout)           f32   [b1 | b2]
    w3_ref:  (2*Cout, Cout)        bf16  conv3 weight, rows reordered to [max|avg]
    b3_ref:  (1, Cout)             f32
    y_ref:   (1, Ho*Wo, Cout)      bf16 token-layout output for image n
    pad_ref: (2*Ho+2, 2*Wo+2, Cin) VMEM scratch holding the padded image
    """
    H, W = x_ref.shape[1], x_ref.shape[2]
    HP, WP, cin = pad_ref.shape
    Ho, Wo = (HP - 2) // 2, (WP - 2) // 2
    cout = y_ref.shape[-1]
    dt = pad_ref.dtype
    # Large-negative pad is safe: every 3x3/s2/p1 window has >= 1 real element.
    neg = jnp.finfo(dt).min

    # ---- padding: write only the 1-wide halo, then the image once ----
    pad_ref[0:1, :, :] = jnp.full((1, WP, cin), neg, dt)
    pad_ref[H + 1:HP, :, :] = jnp.full((HP - H - 1, WP, cin), neg, dt)
    pad_ref[1:H + 1, 0:1, :] = jnp.full((H, 1, cin), neg, dt)
    pad_ref[1:H + 1, W + 1:WP, :] = jnp.full((H, WP - W - 1, cin), neg, dt)
    pad_ref[1:H + 1, 1:W + 1, :] = x_ref[0].astype(dt)

    # ---- W direction: out col j <- padded cols 2j, 2j+1, 2j+2 ----
    # (sublane-strided reads; channel/lane dim stays dense)
    c0 = pad_ref[:, pl.ds(0, Wo, stride=2), :]
    c1 = pad_ref[:, pl.ds(1, Wo, stride=2), :]
    c2 = pad_ref[:, pl.ds(2, Wo, stride=2), :]
    pw = jnp.maximum(jnp.maximum(c0, c1), c2)                     # (HP, Wo, Cin)

    # ---- H direction: out row i <- rows 2i, 2i+1, 2i+2 (leading-dim reshape trick,
    # trailing (Wo, Cin) tiles untouched -> layout no-op) ----
    r01 = pw[0:2 * Ho].reshape(Ho, 2, Wo, cin)
    r2 = pw[2:2 * Ho + 2].reshape(Ho, 2, Wo, cin)
    pooled = jnp.maximum(jnp.maximum(r01[:, 0], r01[:, 1]), r2[:, 0])  # (Ho, Wo, Cin)

    # ---- 1x1 convs + residual on the MXU (bf16 inputs, f32 accumulate) ----
    p = pooled.reshape(Ho * Wo, cin).astype(jnp.bfloat16)
    fused = (jnp.dot(p, w12_ref[...], preferred_element_type=jnp.float32)
             + b12_ref[...])                                      # [max_2 | avg_2]
    max2 = fused[:, :cout]                                        # residual branch
    y = (jnp.dot(fused.astype(jnp.bfloat16), w3_ref[...],
                 preferred_element_type=jnp.float32)
         + b3_ref[...] + max2)
    y_ref[0] = y.astype(y_ref.dtype)


def _cls_fc_kernel(cls_ref, wfc_ref, bfc_ref, out_ref):
    """cls_token Linear: (N, Cin) @ (Cin, Cout) + b."""
    out_ref[...] = (jnp.dot(cls_ref[...], wfc_ref[...],
                            preferred_element_type=jnp.float32)
                    + bfc_ref[...]).astype(out_ref.dtype)


def pack_params(params):
    """One-time weight packing (call OUTSIDE jit; params are static)."""
    bf16, f32 = jnp.bfloat16, jnp.float32
    cout = params["b1"].shape[0]
    return {
        # one wide matmul gives [max_2 | avg_2] (both convs read the max-pool)
        "w12": jnp.concatenate([params["w1"], params["w2"]], axis=1).astype(bf16),
        "b12": jnp.concatenate([params["b1"], params["b2"]]).reshape(1, 2 * cout).astype(f32),
        # reorder conv3 rows so [max_2 | avg_2] @ w3r == conv3(cat([avg_2, max_2]))
        "w3r": jnp.concatenate([params["w3"][cout:], params["w3"][:cout]], axis=0).astype(bf16),
        "b3": params["b3"].reshape(1, cout).astype(f32),
        "wfc": params["wfc"].astype(bf16),
        "bfc": params["bfc"].reshape(1, cout).astype(f32),
    }


def conv_head_pooling_forward(x_nchw, cls_token, packed):
    """x_nchw: (N, Cin, H, W); cls_token: (N, 1, Cin); packed = pack_params(...).
    Returns (y (N, Cout, Ho, Wo) f32, cls_out (N, 1, Cout) f32) — the PyTorch contract."""
    N, Cin, H, W = x_nchw.shape
    Cout = packed["b3"].shape[1]
    Ho = (H + 2 - 3) // 2 + 1
    Wo = (W + 2 - 3) // 2 + 1

    # Single layout pass: NCHW -> NHWC, bf16 (channels -> lanes; halves the HBM read).
    # TODO(synk): fold this transpose into the pooling DMA with a custom strided copy.
    x_nhwc = jnp.transpose(x_nchw, (0, 2, 3, 1)).astype(jnp.bfloat16)

    # ---- fused max-pool + 1x1 convs, one image per grid step (parallel axis) ----
    # TODO(synk): for Cin > 128 or large H*W, add channel / H-row (1-row halo) grid
    # axes so the per-step VMEM stays under the scoped limit (16/32/32 MiB defaults).
    y_tok = pl.pallas_call(
        _pool_head_kernel,
        out_shape=jax.ShapeDtypeStruct((N, Ho * Wo, Cout), jnp.bfloat16),
        grid=(N,),
        in_specs=[
            pl.BlockSpec((1, H, W, Cin), lambda n: (n, 0, 0, 0)),   # image n
            pl.BlockSpec((Cin, 2 * Cout), lambda n: (0, 0)),        # [w1 | w2]
            pl.BlockSpec((1, 2 * Cout), lambda n: (0, 0)),          # [b1 | b2]
            pl.BlockSpec((2 * Cout, Cout), lambda n: (0, 0)),       # reordered w3
            pl.BlockSpec((1, Cout), lambda n: (0, 0)),              # b3
        ],
        out_specs=pl.BlockSpec((1, Ho * Wo, Cout), lambda n: (n, 0, 0)),
        scratch_shapes=[pltpu.VMEM((2 * Ho + 2, 2 * Wo + 2, Cin), _POOL_DTYPE)],
        compiler_params=pltpu.CompilerParams(dimension_semantics=("parallel",)),
    )(x_nhwc, packed["w12"], packed["b12"], packed["w3r"], packed["b3"])

    # ---- cls-token fc: tiny, kept out of the parallel per-image kernel ----
    cls2 = cls_token.reshape(N, Cin).astype(jnp.bfloat16)
    cls_out = pl.pallas_call(
        _cls_fc_kernel,
        out_shape=jax.ShapeDtypeStruct((N, Cout), jnp.float32),
        grid=(1,),
        in_specs=[
            pl.BlockSpec((N, Cin), lambda i: (0, 0)),
            pl.BlockSpec((Cin, Cout), lambda i: (0, 0)),
            pl.BlockSpec((1, Cout), lambda i: (0, 0)),
        ],
        out_specs=pl.BlockSpec((N, Cout), lambda i: (0, 0)),
        compiler_params=pltpu.CompilerParams(dimension_semantics=("arbitrary",)),
    )(cls2, packed["wfc"], packed["bfc"])

    # PyTorch module contract is NCHW.
    # TODO(synk): PiT immediately re-flattens to (N, Ho*Wo, C) tokens — hand y_tok
    # through directly there and drop this transpose/cast pass.
    y = jnp.transpose(y_tok.reshape(N, Ho, Wo, Cout), (0, 3, 1, 2)).astype(jnp.float32)
    return y, cls_out.reshape(N, 1, Cout)


def _reference(x, cls_token, p):
    """Pure-JAX reference of the PyTorch forward (NCHW)."""
    hi = jax.lax.Precision.HIGHEST
    mx = lax.reduce_window(x, -jnp.inf, lax.max,
                           (1, 1, 3, 3), (1, 1, 2, 2),
                           ((0, 0), (0, 0), (1, 1), (1, 1)))
    max2 = jnp.einsum("nchw,co->nohw", mx, p["w1"], precision=hi) + p["b1"][None, :, None, None]
    avg2 = jnp.einsum("nchw,co->nohw", mx, p["w2"], precision=hi) + p["b2"][None, :, None, None]
    cat = jnp.concatenate([avg2, max2], axis=1)
    y = jnp.einsum("nchw,co->nohw", cat, p["w3"], precision=hi) + p["b3"][None, :, None, None] + max2
    cls = jnp.einsum("ntc,co->nto", cls_token, p["wfc"], precision=hi) + p["bfc"]
    return y, cls


if __name__ == "__main__":
    N, Cin, Cout, H, W = 2, 32, 64, 16, 16
    key = jax.random.PRNGKey(0)
    ks = jax.random.split(key, 10)
    x = jax.random.normal(ks[0], (N, Cin, H, W), jnp.float32)
    cls_token = jax.random.normal(ks[1], (N, 1, Cin), jnp.float32)
    # Deterministic synthetic parameters (shapes from the module's __init__);
    # conv/linear weights are stored pre-transposed as (in, out).
    params = {
        "w1": 0.1 * jax.random.normal(ks[2], (Cin, Cout), jnp.float32),
        "b1": 0.1 * jax.random.normal(ks[3], (Cout,), jnp.float32),
        "w2": 0.1 * jax.random.normal(ks[4], (Cin, Cout), jnp.float32),
        "b2": 0.1 * jax.random.normal(ks[5], (Cout,), jnp.float32),
        "w3": 0.1 * jax.random.normal(ks[6], (2 * Cout, Cout), jnp.float32),
        "b3": 0.1 * jax.random.normal(ks[7], (Cout,), jnp.float32),
        "wfc": 0.1 * jax.random.normal(ks[8], (Cin, Cout), jnp.float32),
        "bfc": 0.1 * jax.random.normal(ks[9], (Cout,), jnp.float32),
    }

    packed = pack_params(params)            # one-time packing, outside jit
    fwd = jax.jit(conv_head_pooling_forward)
    y, cls_out = fwd(x, cls_token, packed)
    jax.block_until_ready((y, cls_out))

    y_ref, cls_ref = _reference(x, cls_token, params)
    assert y.shape == (N, Cout, H // 2, W // 2) and cls_out.shape == (N, 1, Cout)
    # bf16 activations/weights/output vs f32-HIGHEST reference: intentional precision choice.
    assert jnp.allclose(y, y_ref, atol=5e-2, rtol=5e-2), "pooled-feature mismatch"
    assert jnp.allclose(cls_out, cls_ref, atol=5e-2, rtol=5e-2), "cls_token mismatch"
    print("KERNEL_OK")
</pallas_src>

<mosaic_0001>
module attributes {stable_mosaic.version = 11 : i64} {
  func.func @_pool_head_kernel(%arg0: i32, %arg1: memref<1x16x16x32xbf16, #tpu.memory_space<vmem>>, %arg2: memref<32x128xbf16, #tpu.memory_space<vmem>>, %arg3: memref<1x128xf32, #tpu.memory_space<vmem>>, %arg4: memref<128x64xbf16, #tpu.memory_space<vmem>>, %arg5: memref<1x64xf32, #tpu.memory_space<vmem>>, %arg6: memref<1x64x64xbf16, #tpu.memory_space<vmem>>, %arg7: memref<18x18x32xf32, #tpu.memory_space<vmem>>) attributes {dimension_semantics = [#tpu.dimension_semantics<parallel>], iteration_bounds = array<i64: 2>, scalar_prefetch = 0 : i64, scratch_operands = 1 : i64, tpu.core_type = #tpu.core_type<tc>, window_params = [{transform_indices = @transform_0, window_bounds = array<i64: 1, 16, 16, 32>}, {pipeline_mode = #tpu.pipeline_mode<synchronous>, transform_indices = @transform_1, window_bounds = array<i64: 32, 128>}, {pipeline_mode = #tpu.pipeline_mode<synchronous>, transform_indices = @transform_2, window_bounds = array<i64: 1, 128>}, {pipeline_mode = #tpu.pipeline_mode<synchronous>, transform_indices = @transform_3, window_bounds = array<i64: 128, 64>}, {pipeline_mode = #tpu.pipeline_mode<synchronous>, transform_indices = @transform_4, window_bounds = array<i64: 1, 64>}, {transform_indices = @transform_5, window_bounds = array<i64: 1, 64, 64>}]} {
    %cst = arith.constant -3.40282347E+38 : f32
    %0 = vector.broadcast %cst : f32 to vector<1x18x32xf32>
    %c0 = arith.constant 0 : index
    %c0_0 = arith.constant 0 : index
    %c0_1 = arith.constant 0 : index
    %1 = vector.load %arg7[%c0, %c0_0, %c0_1] : memref<18x18x32xf32, #tpu.memory_space<vmem>>, vector<1x18x32xf32>
    tpu.vector_store %arg7[%c0, %c0_0, %c0_1], %0 {strides = array<i32>} : memref<18x18x32xf32, #tpu.memory_space<vmem>>, vector<1x18x32xf32>,
    %cst_2 = arith.constant -3.40282347E+38 : f32
    %2 = vector.broadcast %cst_2 : f32 to vector<1x18x32xf32>
    %c17 = arith.constant 17 : index
    %c0_3 = arith.constant 0 : index
    %c0_4 = arith.constant 0 : index
    %3 = vector.load %arg7[%c17, %c0_3, %c0_4] : memref<18x18x32xf32, #tpu.memory_space<vmem>>, vector<1x18x32xf32>
    tpu.vector_store %arg7[%c17, %c0_3, %c0_4], %2 {strides = array<i32>} : memref<18x18x32xf32, #tpu.memory_space<vmem>>, vector<1x18x32xf32>,
    %cst_5 = arith.constant -3.40282347E+38 : f32
    %4 = vector.broadcast %cst_5 : f32 to vector<16x1x32xf32>
    %c1 = arith.constant 1 : index
    %c0_6 = arith.constant 0 : index
    %c0_7 = arith.constant 0 : index
    %5 = vector.load %arg7[%c1, %c0_6, %c0_7] : memref<18x18x32xf32, #tpu.memory_space<vmem>>, vector<16x1x32xf32>
    tpu.vector_store %arg7[%c1, %c0_6, %c0_7], %4 {strides = array<i32>} : memref<18x18x32xf32, #tpu.memory_space<vmem>>, vector<16x1x32xf32>,
    %cst_8 = arith.constant -3.40282347E+38 : f32
    %6 = vector.broadcast %cst_8 : f32 to vector<16x1x32xf32>
    %c1_9 = arith.constant 1 : index
    %c17_10 = arith.constant 17 : index
    %c0_11 = arith.constant 0 : index
    %7 = vector.load %arg7[%c1_9, %c17_10, %c0_11] : memref<18x18x32xf32, #tpu.memory_space<vmem>>, vector<16x1x32xf32>
    tpu.vector_store %arg7[%c1_9, %c17_10, %c0_11], %6 {strides = array<i32>} : memref<18x18x32xf32, #tpu.memory_space<vmem>>, vector<16x1x32xf32>,
    %c0_12 = arith.constant 0 : index
    %c0_13 = arith.constant 0 : index
    %c0_14 = arith.constant 0 : index
    %c0_15 = arith.constant 0 : index
    %8 = vector.load %arg1[%c0_12, %c0_13, %c0_14, %c0_15] : memref<1x16x16x32xbf16, #tpu.memory_space<vmem>>, vector<1x16x16x32xbf16>
    %9 = vector.shape_cast %8 : vector<1x16x16x32xbf16> to vector<16x16x32xbf16>
    %10 = arith.extf %9 : vector<16x16x32xbf16> to vector<16x16x32xf32>
    %c1_16 = arith.constant 1 : index
    %c1_17 = arith.constant 1 : index
    %c0_18 = arith.constant 0 : index
    %11 = vector.load %arg7[%c1_16, %c1_17, %c0_18] : memref<18x18x32xf32, #tpu.memory_space<vmem>>, vector<16x16x32xf32>
    tpu.vector_store %arg7[%c1_16, %c1_17, %c0_18], %10 {strides = array<i32>} : memref<18x18x32xf32, #tpu.memory_space<vmem>>, vector<16x16x32xf32>,
    %c0_19 = arith.constant 0 : index
    %c0_20 = arith.constant 0 : index
    %c0_21 = arith.constant 0 : index
    %12 = tpu.strided_load %arg7[%c0_19, %c0_20, %c0_21] {strides = array<i32: 1, 2, 1>} : memref<18x18x32xf32, #tpu.memory_space<vmem>>, vector<18x8x32xf32>
    %c0_22 = arith.constant 0 : index
    %c1_23 = arith.constant 1 : index
    %c0_24 = arith.constant 0 : index
    %13 = tpu.strided_load %arg7[%c0_22, %c1_23, %c0_24] {strides = array<i32: 1, 2, 1>} : memref<18x18x32xf32, #tpu.memory_space<vmem>>, vector<18x8x32xf32>
    %c0_25 = arith.constant 0 : index
    %c2 = arith.constant 2 : index
    %c0_26 = arith.constant 0 : index
    %14 = tpu.strided_load %arg7[%c0_25, %c2, %c0_26] {strides = array<i32: 1, 2, 1>} : memref<18x18x32xf32, #tpu.memory_space<vmem>>, vector<18x8x32xf32>
    %15 = arith.maximumf %12, %13 : vector<18x8x32xf32>
    %16 = arith.maximumf %15, %14 : vector<18x8x32xf32>
    %17 = vector.extract_strided_slice %16 {offsets = [0, 0, 0], sizes = [16, 8, 32], strides = [1, 1, 1]} : vector<18x8x32xf32> to vector<16x8x32xf32>
    %18 = vector.shape_cast %17 : vector<16x8x32xf32> to vector<8x2x8x32xf32>
    %19 = vector.extract_strided_slice %16 {offsets = [2, 0, 0], sizes = [16, 8, 32], strides = [1, 1, 1]} : vector<18x8x32xf32> to vector<16x8x32xf32>
    %20 = vector.shape_cast %19 : vector<16x8x32xf32> to vector<8x2x8x32xf32>
    %21 = vector.extract_strided_slice %18 {offsets = [0, 0, 0, 0], sizes = [8, 1, 8, 32], strides = [1, 1, 1, 1]} : vector<8x2x8x32xf32> to vector<8x1x8x32xf32>
    %22 = vector.shape_cast %21 : vector<8x1x8x32xf32> to vector<8x8x32xf32>
    %23 = vector.extract_strided_slice %18 {offsets = [0, 1, 0, 0], sizes = [8, 1, 8, 32], strides = [1, 1, 1, 1]} : vector<8x2x8x32xf32> to vector<8x1x8x32xf32>
    %24 = vector.shape_cast %23 : vector<8x1x8x32xf32> to vector<8x8x32xf32>
    %25 = arith.maximumf %22, %24 : vector<8x8x32xf32>
    %26 = vector.extract_strided_slice %20 {offsets = [0, 0, 0, 0], sizes = [8, 1, 8, 32], strides = [1, 1, 1, 1]} : vector<8x2x8x32xf32> to vector<8x1x8x32xf32>
    %27 = vector.shape_cast %26 : vector<8x1x8x32xf32> to vector<8x8x32xf32>
    %28 = arith.maximumf %25, %27 : vector<8x8x32xf32>
    %29 = vector.shape_cast %28 : vector<8x8x32xf32> to vector<64x32xf32>
    %30 = arith.truncf %29 : vector<64x32xf32> to vector<64x32xbf16>
    %c0_27 = arith.constant 0 : index
    %c0_28 = arith.constant 0 : index
    %31 = vector.load %arg2[%c0_27, %c0_28] : memref<32x128xbf16, #tpu.memory_space<vmem>>, vector<32x128xbf16>
    %cst_29 = arith.constant dense<0.000000e+00> : vector<64x128xf32>
    %32 = tpu.matmul %30, %31, %cst_29 {dimension_numbers = #tpu.dot_dimension_numbers<[1], [0], [0], [1], [0, 0, 1, 1], [], []>} : vector<64x32xbf16>, vector<32x128xbf16>, vector<64x128xf32> -> vector<64x128xf32>
    %c0_30 = arith.constant 0 : index
    %c0_31 = arith.constant 0 : index
    %33 = vector.load %arg3[%c0_30, %c0_31] : memref<1x128xf32, #tpu.memory_space<vmem>>, vector<1x128xf32>
    %34 = vector.broadcast %33 : vector<1x128xf32> to vector<64x128xf32>
    %35 = arith.addf %32, %34 : vector<64x128xf32>
    %36 = vector.extract_strided_slice %35 {offsets = [0, 0], sizes = [64, 64], strides = [1, 1]} : vector<64x128xf32> to vector<64x64xf32>
    %37 = arith.truncf %35 : vector<64x128xf32> to vector<64x128xbf16>
    %c0_32 = arith.constant 0 : index
    %c0_33 = arith.constant 0 : index
    %38 = vector.load %arg4[%c0_32, %c0_33] : memref<128x64xbf16, #tpu.memory_space<vmem>>, vector<128x64xbf16>
    %cst_34 = arith.constant dense<0.000000e+00> : vector<64x64xf32>
    %39 = tpu.matmul %37, %38, %cst_34 {dimension_numbers = #tpu.dot_dimension_numbers<[1], [0], [0], [1], [0, 0, 1, 1], [], []>} : vector<64x128xbf16>, vector<128x64xbf16>, vector<64x64xf32> -> vector<64x64xf32>
    %c0_35 = arith.constant 0 : index
    %c0_36 = arith.constant 0 : index
    %40 = vector.load %arg5[%c0_35, %c0_36] : memref<1x64xf32, #tpu.memory_space<vmem>>, vector<1x64xf32>
    %41 = vector.broadcast %40 : vector<1x64xf32> to vector<64x64xf32>
    %42 = arith.addf %39, %41 : vector<64x64xf32>
    %43 = arith.addf %42, %36 : vector<64x64xf32>
    %44 = arith.truncf %43 : vector<64x64xf32> to vector<64x64xbf16>
    %c0_37 = arith.constant 0 : index
    %c0_38 = arith.constant 0 : index
    %c0_39 = arith.constant 0 : index
    %45 = vector.load %arg6[%c0_37, %c0_38, %c0_39] : memref<1x64x64xbf16, #tpu.memory_space<vmem>>, vector<1x64x64xbf16>
    %46 = vector.shape_cast %45 : vector<1x64x64xbf16> to vector<64x64xbf16>
    %47 = vector.shape_cast %44 : vector<64x64xbf16> to vector<1x64x64xbf16>
    tpu.vector_store %arg6[%c0_37, %c0_38, %c0_39], %47 {strides = array<i32>} : memref<1x64x64xbf16, #tpu.memory_space<vmem>>, vector<1x64x64xbf16>,
    return
  }
  func.func @transform_0(%arg0: i32) -> (i32, i32, i32, i32) {
    %c0_i32 = arith.constant 0 : i32
    %c0_i32_0 = arith.constant 0 : i32
    %c0_i32_1 = arith.constant 0 : i32
    %c0_i32_2 = arith.constant 0 : i32
    return %arg0, %c0_i32, %c0_i32_0, %c0_i32_1 : i32, i32, i32, i32
  }
  func.func @transform_1(%arg0: i32) -> (i32, i32) {
    %c0_i32 = arith.constant 0 : i32
    %c0_i32_0 = arith.constant 0 : i32
    %c0_i32_1 = arith.constant 0 : i32
    return %c0_i32, %c0_i32_0 : i32, i32
  }
  func.func @transform_2(%arg0: i32) -> (i32, i32) {
    %c0_i32 = arith.constant 0 : i32
    %c0_i32_0 = arith.constant 0 : i32
    %c0_i32_1 = arith.constant 0 : i32
    return %c0_i32, %c0_i32_0 : i32, i32
  }
  func.func @transform_3(%arg0: i32) -> (i32, i32) {
    %c0_i32 = arith.constant 0 : i32
    %c0_i32_0 = arith.constant 0 : i32
    %c0_i32_1 = arith.constant 0 : i32
    return %c0_i32, %c0_i32_0 : i32, i32
  }
  func.func @transform_4(%arg0: i32) -> (i32, i32) {
    %c0_i32 = arith.constant 0 : i32
    %c0_i32_0 = arith.constant 0 : i32
    %c0_i32_1 = arith.constant 0 : i32
    return %c0_i32, %c0_i32_0 : i32, i32
  }
  func.func @transform_5(%arg0: i32) -> (i32, i32, i32) {
    %c0_i32 = arith.constant 0 : i32
    %c0_i32_0 = arith.constant 0 : i32
    %c0_i32_1 = arith.constant 0 : i32
    return %arg0, %c0_i32, %c0_i32_0 : i32, i32, i32
  }
}

module attributes {stable_mosaic.version = 11 : i64} {
  func.func @_cls_fc_kernel(%arg0: i32, %arg1: memref<2x32xbf16, #tpu.memory_space<vmem>>, %arg2: memref<32x64xbf16, #tpu.memory_space<vmem>>, %arg3: memref<1x64xf32, #tpu.memory_space<vmem>>, %arg4: memref<2x64xf32, #tpu.memory_space<vmem>>) attributes {dimension_semantics = [#tpu.dimension_semantics<arbitrary>], iteration_bounds = array<i64: 1>, scalar_prefetch = 0 : i64, scratch_operands = 0 : i64, tpu.core_type = #tpu.core_type<tc>, window_params = [{pipeline_mode = #tpu.pipeline_mode<synchronous>, transform_indices = @transform_0, window_bounds = array<i64: 2, 32>}, {pipeline_mode = #tpu.pipeline_mode<synchronous>, transform_indices = @transform_1, window_bounds = array<i64: 32, 64>}, {pipeline_mode = #tpu.pipeline_mode<synchronous>, transform_indices = @transform_2, window_bounds = array<i64: 1, 64>}, {pipeline_mode = #tpu.pipeline_mode<synchronous>, transform_indices = @transform_3, window_bounds = array<i64: 2, 64>}]} {
    %c0 = arith.constant 0 : index
    %c0_0 = arith.constant 0 : index
    %0 = vector.load %arg1[%c0, %c0_0] : memref<2x32xbf16, #tpu.memory_space<vmem>>, vector<2x32xbf16>
    %c0_1 = arith.constant 0 : index
    %c0_2 = arith.constant 0 : index
    %1 = vector.load %arg2[%c0_1, %c0_2] : memref<32x64xbf16, #tpu.memory_space<vmem>>, vector<32x64xbf16>
    %cst = arith.constant dense<0.000000e+00> : vector<2x64xf32>
    %2 = tpu.matmul %0, %1, %cst {dimension_numbers = #tpu.dot_dimension_numbers<[1], [0], [0], [1], [0, 0, 1, 1], [], []>} : vector<2x32xbf16>, vector<32x64xbf16>, vector<2x64xf32> -> vector<2x64xf32>
    %c0_3 = arith.constant 0 : index
    %c0_4 = arith.constant 0 : index
    %3 = vector.load %arg3[%c0_3, %c0_4] : memref<1x64xf32, #tpu.memory_space<vmem>>, vector<1x64xf32>
    %4 = vector.broadcast %3 : vector<1x64xf32> to vector<2x64xf32>
    %5 = arith.addf %2, %4 : vector<2x64xf32>
    %c0_5 = arith.constant 0 : index
    %c0_6 = arith.constant 0 : index
    %6 = vector.load %arg4[%c0_5, %c0_6] : memref<2x64xf32, #tpu.memory_space<vmem>>, vector<2x64xf32>
    tpu.vector_store %arg4[%c0_5, %c0_6], %5 {strides = array<i32>} : memref<2x64xf32, #tpu.memory_space<vmem>>, vector<2x64xf32>,
    return
  }
  func.func @transform_0(%arg0: i32) -> (i32, i32) {
    %c0_i32 = arith.constant 0 : i32
    %c0_i32_0 = arith.constant 0 : i32
    %c0_i32_1 = arith.constant 0 : i32
    return %c0_i32, %c0_i32_0 : i32, i32
  }
  func.func @transform_1(%arg0: i32) -> (i32, i32) {
    %c0_i32 = arith.constant 0 : i32
    %c0_i32_0 = arith.constant 0 : i32
    %c0_i32_1 = arith.constant 0 : i32
    return %c0_i32, %c0_i32_0 : i32, i32
  }
  func.func @transform_2(%arg0: i32) -> (i32, i32) {
    %c0_i32 = arith.constant 0 : i32
    %c0_i32_0 = arith.constant 0 : i32
    %c0_i32_1 = arith.constant 0 : i32
    return %c0_i32, %c0_i32_0 : i32, i32
  }
  func.func @transform_3(%arg0: i32) -> (i32, i32) {
    %c0_i32 = arith.constant 0 : i32
    %c0_i32_0 = arith.constant 0 : i32
    %c0_i32_1 = arith.constant 0 : i32
    return %c0_i32, %c0_i32_0 : i32, i32
  }
}

</mosaic_0001>

<llo_original>
// kernel: conv_head_pooling_forward.3
$region0: #{conv_head_pooling_forward.3}
  #allocation0 [shape = 'u32[]', space=smem, size = 0x4, offset = 0x4, fixed_abs, tag = 'smem constant byte address 0x4 - core index']
  #allocation1 [shape = 'u32[144,128]{1,0:T(1,128)}', space=vmem, size = 0x12000, scoped, tag = 'internal scratch']
  %s0 = inlined_call_operand.vmem [shape: bf16[2,32], index: 0, kind: input, shape index: {}]
  %s1 = inlined_call_operand.vmem [shape: bf16[32,64], index: 1, kind: input, shape index: {}]
  %s2 = inlined_call_operand.vmem [shape: f32[1,64], index: 2, kind: input, shape index: {}]
  %s3 = inlined_call_operand.hbm [shape: f32[2,64], index: 3, kind: output, shape index: {}]
  %s4 = sld [smem:[#allocation0]]
  $region22: #{conv_head_pooling_forward.3} parent=0
    _
  %s6 = ssub.s32 1, %s4
  %s7 = scalar_select 0, %s6, %s4
  $region1: #{conv_head_pooling_forward.3} parent=0
    #allocation2 [shape = 'u8[1024]{0}', space=vmem, size = 0x400, scoped, tag = 'output window, operand 0, single buffered']
    #allocation3 [shape = 's32[1]{0}', space=sflag, size = 0x4, scoped, tag = 'scoped memory for conv_head_pooling_forward.3']
    %8 = vsyncpa [#allocation3], 0
    // Predicated region
    $region2: #{conv_head_pooling_forward.3} parent=1 // pred_check
      _
    $region3: #{conv_head_pooling_forward.3} parent=1 // pred_check_branch
      %10 = sbr.rel (0) target = $region5
    $region4: #{conv_head_pooling_forward.3} parent=1 // pred_region
      _
    $region5: #{conv_head_pooling_forward.3} parent=1 // pred_fallthru
      _
    // Predicated region
    $region6: #{conv_head_pooling_forward.3} parent=1 // pred_check
      _
    $region7: #{conv_head_pooling_forward.3} parent=1 // pred_check_branch
      %12 = sbr.rel (0) target = $region9
    $region8: #{conv_head_pooling_forward.3} parent=1 // pred_region
      _
    $region9: #{conv_head_pooling_forward.3} parent=1 // pred_fallthru
      _
    // Predicated region
    $region10: #{conv_head_pooling_forward.3} parent=1 // pred_check
      _
    $region11: #{conv_head_pooling_forward.3} parent=1 // pred_check_branch
      %14 = sbr.rel (0) target = $region13
    $region12: #{conv_head_pooling_forward.3} parent=1 // pred_region
      _
    $region13: #{conv_head_pooling_forward.3} parent=1 // pred_fallthru
      _
    %v16 = vld [vmem:[%s0] sm:$0x1]
    %v17 = vld [vmem:[%s1] sm:$0xf]
    %v18 = vld [vmem:[%s1 + $0x4] sm:$0xf]
    %v19 = vld [vmem:[%s1 + $0x8] sm:$0xf]
    %v20 = vld [vmem:[%s1 + $0xc] sm:$0xf]
    %v21 = vld [vmem:[%s2] sm:$0x1]
    %v23 = vlaneseq
    %v24 = vshrl.u32 %v23, 7
    %v25 = vsub.s32 0, %v24
    %v26 = vrot.slane %v21, %v25
    %v32 = vunpack.c.l.b16 %v17
    %v33 = vunpack.c.l.b16 %v18
    %v34 = vunpack.c.l.b16 %v19
    %v35 = vunpack.c.l.b16 %v20
    %v36 = vpack.c.b16 %v33, %v32
    %v37 = vpack.c.b16 %v35, %v34
    %vm40 = vcmask 261120
    %v42 = vsel %vm40, %v16, 0
    %44 = vmatprep.subr.bf16.mxu0 0
    %45 = vmatpush1.bf16.msra.mxu0 0
    %46 = vmatprep.subr.bf16.mxu0 0
    %47 = vmatpush1.bf16.msra.mxu0 0
    %48 = vmatprep.subr.bf16.mxu0 0
    %49 = vmatpush1.bf16.msra.mxu0 0
    %50 = vmatprep.subr.bf16.mxu0 0
    %51 = vmatpush1.bf16.msra.mxu0 0
    %52 = vmatprep.subr.bf16.mxu0 0
    %53 = vmatpush1.bf16.msra.mxu0 0
    %54 = vmatprep.subr.bf16.mxu0 0
    %55 = vmatpush1.bf16.msra.mxu0 0
    %56 = vmatprep.subr.bf16.mxu0 0
    %57 = vmatpush1.bf16.msra.mxu0 %v37
    %58 = vmatprep.subr.bf16.mxu0 0
    %59 = vmatpush1.bf16.msra.mxu0 %v36
    %60 = vmatprep.subr.bf16.mxu0 0
    %61 = vmatpush2.bf16.msra.mxu0 0
    %62 = vmatprep.subr.bf16.mxu0 0
    %63 = vmatpush2.bf16.msra.mxu0 0
    %64 = vmatprep.subr.bf16.mxu0 0
    %65 = vmatpush2.bf16.msra.mxu0 0
    %66 = vmatprep.subr.bf16.mxu0 0
    %67 = vmatpush2.bf16.msra.mxu0 0
    %68 = vmatprep.subr.bf16.mxu0 0
    %69 = vmatpush2.bf16.msra.mxu0 0
    %70 = vmatprep.subr.bf16.mxu0 0
    %71 = vmatpush2.bf16.msra.mxu0 0
    %72 = vmatprep.subr.bf16.mxu0 0
    %73 = vmatpush2.bf16.msra.mxu0 0
    %74 = vmatprep.subr.bf16.mxu0 0
    %75 = vmatpush2.bf16.msra.mxu0 0
    %76 = vmatprep.mubr.bf16.mxu0 0
    %77 = vmatmul.mubr.bf16.gmra.mxu0 %v42
    %v78 = vpop.f32.mrf.mxu0
    %v79 = vadd.f32 %v26, %v78
    %v80 = vpop.f32.mrf.mxu0
    %v81 = vpop.f32.mrf.mxu0
    %v82 = vpop.f32.mrf.mxu0
    %83 = vdwg.mxu0
    %vm84 = vcmask 517120
    %85 = vst.msk [vmem:[#allocation2] sm:$0x3] %vm84, %v79
    // Predicated region
    $region14: #{conv_head_pooling_forward.3} parent=1 // pred_check
      _
    $region15: #{conv_head_pooling_forward.3} parent=1 // pred_check_branch
      %87 = sbr.rel (0) target = $region17
    $region16: #{conv_head_pooling_forward.3} parent=1 // pred_region
      %s89 = ssub.s32 32, 32
      %90 = vsyncadd [#allocation3], %s89
      %s92 = sshll.u32 [#allocation2], 4
      %s93 = int_to_ptr.vmem [resolvable:$true] %s92
      %95 = dma.vmem_to_hbm [thread:$0]  %s93, 32, %s3, [#allocation3]
    $region17: #{conv_head_pooling_forward.3} parent=1 // pred_fallthru
      _
    // Predicated region
    $region18: #{conv_head_pooling_forward.3} parent=1 // pred_check
      _
    $region19: #{conv_head_pooling_forward.3} parent=1 // pred_check_branch
      %97 = sbr.rel (0) target = $region21
    $region20: #{conv_head_pooling_forward.3} parent=1 // pred_region
      %98 = dma.done [#allocation3], 32
    $region21: #{conv_head_pooling_forward.3} parent=1 // pred_fallthru
      _
    %99 = vsyncpa [#allocation3], 1

// kernel: conv_head_pooling_forward.2
$region0: #{conv_head_pooling_forward.2}
  #allocation0 [shape = 'u32[]', space=smem, size = 0x4, offset = 0x4, fixed_abs, tag = 'smem constant byte address 0x4 - core index']
  #allocation1 [shape = 'u32[144,128]{1,0:T(1,128)}', space=vmem, size = 0x12000, scoped, tag = 'internal scratch']
  #allocation2 [shape = 'f32[18,18,32]{2,1,0:T(8,128)}', space=vmem, size = 0x36000, scoped, tag = 'scratch operand']
  %s0 = inlined_call_operand.vmem [shape: bf16[2,16,16,32], index: 0, kind: input, shape index: {}]
  %s1 = inlined_call_operand.vmem [shape: bf16[32,128], index: 1, kind: input, shape index: {}]
  %s2 = inlined_call_operand.vmem [shape: f32[1,128], index: 2, kind: input, shape index: {}]
  %s3 = inlined_call_operand.vmem [shape: bf16[128,64], index: 3, kind: input, shape index: {}]
  %s4 = inlined_call_operand.vmem [shape: f32[1,64], index: 4, kind: input, shape index: {}]
  %s5 = inlined_call_operand.vmem [shape: bf16[2,64,64], index: 5, kind: output, shape index: {}]
  %s6 = sld [smem:[#allocation0]]
  $region53: #{conv_head_pooling_forward.2} parent=0
    _
  %s8 = ssub.s32 1, %s6
  %s9 = scalar_select 0, %s8, %s6
  loop: start=0, step=1, limit=4
  $region2: #{conv_head_pooling_forward.2} parent=0 // loop_pre_header
    _
  $region3: #{conv_head_pooling_forward.2} parent=0 // loop_header
    %s11 = sphi 0, %s15
    %p12 = scmp.ge.s32.totalorder %s11, 4
    %s21 = sphi 0, %s23
    %s24 = sphi 0, %s21
    %s25 = sphi 0, %s24
    %s41 = sphi 0, %s25
    %s45 = sphi 0, %s45
    %s47 = sphi 0, %s45
    %s48 = sphi 0, %s47
    %s62 = sphi 0, %s48
    %s66 = sphi 0, %s66
    %s68 = sphi 0, %s66
    %s69 = sphi 0, %s68
    %s83 = sphi 0, %s69
    %s87 = sphi 0, %s87
    %s89 = sphi 0, %s87
    %s90 = sphi 0, %s89
    %s104 = sphi 0, %s90
    %s108 = sphi 0, %s108
    %s110 = sphi 0, %s108
    %s111 = sphi 0, %s110
    %s125 = sphi 0, %s111
    %s131 = sphi 0, %s133
    %s134 = sphi 0, %s131
    %s135 = sphi 0, %s134
    %s151 = sphi 0, %s135
  $region4: #{conv_head_pooling_forward.2} parent=0 // loop_header_branch
    %14 = sbr.rel (%p12) target = $region8
  $region5: #{conv_head_pooling_forward.2} parent=0 // loop_body
    %s16 = ssub.s32 %s11, 1
    %s17 = ssub.s32 %s11, 2
    %s18 = sadd.s32 %s11, 1
    %s19 = ssub.s32 %s11, %s18
    %p20 = scmp.eq.s32.totalorder %s19, 0
    %s22 = sadd.s32 %s21, 1
    %s23 = scalar_select %p20, %s21, %s22
    %p26 = pneg %p20
    %p27 = scmp.eq.s32.totalorder %s11, 1
    %p28 = por %p26, %p27
    %p29 = scmp.ne.s32.totalorder %s21, %s24
    %p30 = scmp.eq.s32.totalorder %s11, 0
    %p31 = por %p29, %p30
    %p32 = scmp.ne.s32.totalorder %s21, %s24
    %p33 = scmp.eq.s32.totalorder %s16, 1
    %p34 = por %p32, %p33
    %p35 = scmp.ne.s32.totalorder %s24, %s25
    %p36 = scmp.eq.s32.totalorder %s16, 0
    %p37 = por %p35, %p36
    %p38 = scmp.ne.s32.totalorder %s24, %s25
    %p39 = scmp.eq.s32.totalorder %s17, 1
    %p40 = por %p38, %p39
    %p42 = scmp.ne.s32.totalorder %s25, %s41
    %p43 = scmp.eq.s32.totalorder %s17, 0
    %p44 = por %p42, %p43
    %s46 = sadd.s32 %s45, 1
    %p49 = scmp.eq.s32.totalorder %s11, 1
    %p50 = scmp.ne.s32.totalorder %s45, %s47
    %p51 = scmp.eq.s32.totalorder %s11, 0
    %p52 = por %p50, %p51
    %p53 = scmp.ne.s32.totalorder %s45, %s47
    %p54 = scmp.eq.s32.totalorder %s16, 1
    %p55 = por %p53, %p54
    %p56 = scmp.ne.s32.totalorder %s47, %s48
    %p57 = scmp.eq.s32.totalorder %s16, 0
    %p58 = por %p56, %p57
    %p59 = scmp.ne.s32.totalorder %s47, %s48
    %p60 = scmp.eq.s32.totalorder %s17, 1
    %p61 = por %p59, %p60
    %p63 = scmp.ne.s32.totalorder %s48, %s62
    %p64 = scmp.eq.s32.totalorder %s17, 0
    %p65 = por %p63, %p64
    %s67 = sadd.s32 %s66, 1
    %p70 = scmp.eq.s32.totalorder %s11, 1
    %p71 = scmp.ne.s32.totalorder %s66, %s68
    %p72 = scmp.eq.s32.totalorder %s11, 0
    %p73 = por %p71, %p72
    %p74 = scmp.ne.s32.totalorder %s66, %s68
    %p75 = scmp.eq.s32.totalorder %s16, 1
    %p76 = por %p74, %p75
    %p77 = scmp.ne.s32.totalorder %s68, %s69
    %p78 = scmp.eq.s32.totalorder %s16, 0
    %p79 = por %p77, %p78
    %p80 = scmp.ne.s32.totalorder %s68, %s69
    %p81 = scmp.eq.s32.totalorder %s17, 1
    %p82 = por %p80, %p81
    %p84 = scmp.ne.s32.totalorder %s69, %s83
    %p85 = scmp.eq.s32.totalorder %s17, 0
    %p86 = por %p84, %p85
    %s88 = sadd.s32 %s87, 1
    %p91 = scmp.eq.s32.totalorder %s11, 1
    %p92 = scmp.ne.s32.totalorder %s87, %s89
    %p93 = scmp.eq.s32.totalorder %s11, 0
    %p94 = por %p92, %p93
    %p95 = scmp.ne.s32.totalorder %s87, %s89
    %p96 = scmp.eq.s32.totalorder %s16, 1
    %p97 = por %p95, %p96
    %p98 = scmp.ne.s32.totalorder %s89, %s90
    %p99 = scmp.eq.s32.totalorder %s16, 0
    %p100 = por %p98, %p99
    %p101 = scmp.ne.s32.totalorder %s89, %s90
    %p102 = scmp.eq.s32.totalorder %s17, 1
    %p103 = por %p101, %p102
    %p105 = scmp.ne.s32.totalorder %s90, %s104
    %p106 = scmp.eq.s32.totalorder %s17, 0
    %p107 = por %p105, %p106
    %s109 = sadd.s32 %s108, 1
    %p112 = scmp.eq.s32.totalorder %s11, 1
    %p113 = scmp.ne.s32.totalorder %s108, %s110
    %p114 = scmp.eq.s32.totalorder %s11, 0
    %p115 = por %p113, %p114
    %p116 = scmp.ne.s32.totalorder %s108, %s110
    %p117 = scmp.eq.s32.totalorder %s16, 1
    %p118 = por %p116, %p117
    %p119 = scmp.ne.s32.totalorder %s110, %s111
    %p120 = scmp.eq.s32.totalorder %s16, 0
    %p121 = por %p119, %p120
    %p122 = scmp.ne.s32.totalorder %s110, %s111
    %p123 = scmp.eq.s32.totalorder %s17, 1
    %p124 = por %p122, %p123
    %p126 = scmp.ne.s32.totalorder %s111, %s125
    %p127 = scmp.eq.s32.totalorder %s17, 0
    %p128 = por %p126, %p127
    %s129 = ssub.s32 %s11, %s18
    %p130 = scmp.eq.s32.totalorder %s129, 0
    %s132 = sadd.s32 %s131, 1
    %s133 = scalar_select %p130, %s131, %s132
    %p136 = pneg %p130
    %p137 = scmp.eq.s32.totalorder %s11, 1
    %p138 = por %p136, %p137
    %p139 = scmp.ne.s32.totalorder %s131, %s134
    %p140 = scmp.eq.s32.totalorder %s11, 0
    %p141 = por %p139, %p140
    %p142 = scmp.ne.s32.totalorder %s131, %s134
    %p143 = scmp.eq.s32.totalorder %s16, 1
    %p144 = por %p142, %p143
    %p145 = scmp.ne.s32.totalorder %s134, %s135
    %p146 = scmp.eq.s32.totalorder %s16, 0
    %p147 = por %p145, %p146
    %p148 = scmp.ne.s32.totalorder %s134, %s135
    %p149 = scmp.eq.s32.totalorder %s17, 1
    %p150 = por %p148, %p149
    %p152 = scmp.ne.s32.totalorder %s135, %s151
    %p153 = scmp.eq.s32.totalorder %s17, 0
    %p154 = por %p152, %p153
    %p155 = scmp.le.s32.totalorder 1, %s11
    %p156 = scmp.lt.s32.totalorder %s11, 3
    %p157 = pnand %p155, %p156
    %p158 = pneg %p157
    // Predicated region
    $region9: #{conv_head_pooling_forward.2} parent=5 // pred_check
      _
    $region10: #{conv_head_pooling_forward.2} parent=5 // pred_check_branch
      %160 = sbr.rel (%p157) target = $region12
    $region11: #{conv_head_pooling_forward.2} parent=5 // pred_region
      %s161 = ssub.s32 %s11, 1
      // Predicated region
      $region13: #{conv_head_pooling_forward.2} parent=11 // pred_check
        %p162 = pneg %p58
      $region14: #{conv_head_pooling_forward.2} parent=11 // pred_check_branch
        %164 = sbr.rel (%p162) target = $region16
      $region15: #{conv_head_pooling_forward.2} parent=11 // pred_region
        _
      $region16: #{conv_head_pooling_forward.2} parent=11 // pred_fallthru
        _
      // Predicated region
      $region17: #{conv_head_pooling_forward.2} parent=11 // pred_check
        %p165 = pneg %p79
      $region18: #{conv_head_pooling_forward.2} parent=11 // pred_check_branch
        %167 = sbr.rel (%p165) target = $region20
      $region19: #{conv_head_pooling_forward.2} parent=11 // pred_region
        _
      $region20: #{conv_head_pooling_forward.2} parent=11 // pred_fallthru
        _
      // Predicated region
      $region21: #{conv_head_pooling_forward.2} parent=11 // pred_check
        %p168 = pneg %p100
      $region22: #{conv_head_pooling_forward.2} parent=11 // pred_check_branch
        %170 = sbr.rel (%p168) target = $region24
      $region23: #{conv_head_pooling_forward.2} parent=11 // pred_region
        _
      $region24: #{conv_head_pooling_forward.2} parent=11 // pred_fallthru
        _
      // Predicated region
      $region25: #{conv_head_pooling_forward.2} parent=11 // pred_check
        %p171 = pneg %p121
      $region26: #{conv_head_pooling_forward.2} parent=11 // pred_check_branch
        %173 = sbr.rel (%p171) target = $region28
      $region27: #{conv_head_pooling_forward.2} parent=11 // pred_region
        _
      $region28: #{conv_head_pooling_forward.2} parent=11 // pred_fallthru
        _
    $region12: #{conv_head_pooling_forward.2} parent=5 // pred_fallthru
      _
    %p174 = scmp.lt.s32.totalorder %s11, 2
    // Predicated region
    $region29: #{conv_head_pooling_forward.2} parent=5 // pred_check
      %p175 = pneg %p174
    $region30: #{conv_head_pooling_forward.2} parent=5 // pred_check_branch
      %177 = sbr.rel (%p175) target = $region32
    $region31: #{conv_head_pooling_forward.2} parent=5 // pred_region
      // Predicated region
      $region33: #{conv_head_pooling_forward.2} parent=31 // pred_check
        %p178 = pneg %p31
      $region34: #{conv_head_pooling_forward.2} parent=31 // pred_check_branch
        %180 = sbr.rel (%p178) target = $region36
      $region35: #{conv_head_pooling_forward.2} parent=31 // pred_region
        %p181 = scmp.lt.s32.totalorder %s11, 1
        %s182 = scalar_select %p181, %s11, 1
        %s183 = smul.addr %s182, 32
        %s184 = smul.addr %s183, 4
        %s185 = scalar_lea.vmem %s0, %s184
      $region36: #{conv_head_pooling_forward.2} parent=31 // pred_fallthru
        _
    $region32: #{conv_head_pooling_forward.2} parent=5 // pred_fallthru
      _
    %p186 = scmp.le.s32.totalorder 1, %s11
    %p187 = scmp.lt.s32.totalorder %s11, 3
    %p188 = pnand %p186, %p187
    %p189 = pneg %p188
    // Predicated region
    $region37: #{conv_head_pooling_forward.2} parent=5 // pred_check
      _
    $region38: #{conv_head_pooling_forward.2} parent=5 // pred_check_branch
      %191 = sbr.rel (%p188) target = $region40
    $region39: #{conv_head_pooling_forward.2} parent=5 // pred_region
      %s192 = ssub.s32 %s11, 1
      %p193 = scmp.lt.s32.totalorder %s16, 1
      %s194 = scalar_select %p193, %s16, 1
      %s195 = smul.addr %s194, 32
      %s196 = smul.addr %s195, 4
      %s197 = scalar_lea.vmem %s0, %s196
      %p198 = pneg %p37
      %p199 = pneg %p34
      %p200 = pneg %p58
      %p201 = pneg %p55
      %p202 = pneg %p79
      %p203 = pneg %p76
      %p204 = pneg %p100
      %p205 = pneg %p97
      %p206 = pneg %p121
      %p207 = pneg %p118
      %p208 = pneg %p147
      %p209 = pneg %p144
      %p210 = scmp.lt.s32.totalorder %s16, 1
      %s211 = scalar_select %p210, %s16, 1
      %s212 = smul.addr %s211, 8
      %s213 = smul.addr %s212, 4
      %s214 = scalar_lea.vmem %s5, %s213
      %p215 = scmp.lt.s32.totalorder %s16, 1
      %s216 = scalar_select %p215, %s16, 1
      %s217 = smul.addr %s216, 32
      %s218 = smul.addr %s217, 4
      %s219 = scalar_lea.vmem %s0, %s218
      %p220 = scmp.lt.s32.totalorder %s16, 1
      %s221 = scalar_select %p220, %s16, 1
      %s222 = smul.addr %s221, 8
      %s223 = smul.addr %s222, 4
      %s224 = scalar_lea.vmem %s5, %s223
      %vm226 = vcmask 261120
      %227 = vst.msk [vmem:[#allocation2] sm:$0xff] %vm226, -3.4028235e+38
      %228 = vst.msk [vmem:[#allocation2 + $0x8] sm:$0xff] %vm226, -3.4028235e+38
      %vm229 = vcmask 254976
      %230 = vst.msk [vmem:[#allocation2 + $0x10] sm:$0x3] %vm229, -3.4028235e+38
      %s231 = scalar_lea.vmem [#allocation2], 408
      %232 = vst.msk [vmem:[%s231] sm:$0xff] %vm226, -3.4028235e+38
      %233 = vst.msk [vmem:[%s231 + $0x8] sm:$0xff] %vm226, -3.4028235e+38
      %234 = vst.msk [vmem:[%s231 + $0x10] sm:$0x3] %vm229, -3.4028235e+38
      %s235 = scalar_lea.vmem [#allocation2], 24
      %vm236 = vcmask 253952
      %237 = vst.msk [vmem:[%s235] sm:$0x1] %vm236, -3.4028235e+38
      %238 = vst.msk [vmem:[%s235 + $0x18] sm:$0x1] %vm236, -3.4028235e+38
      %239 = vst.msk [vmem:[%s235 + $0x30] sm:$0x1] %vm236, -3.4028235e+38
      %240 = vst.msk [vmem:[%s235 + $0x48] sm:$0x1] %vm236, -3.4028235e+38
      %241 = vst.msk [vmem:[%s235 + $0x60] sm:$0x1] %vm236, -3.4028235e+38
      %242 = vst.msk [vmem:[%s235 + $0x78] sm:$0x1] %vm236, -3.4028235e+38
      %243 = vst.msk [vmem:[%s235 + $0x90] sm:$0x1] %vm236, -3.4028235e+38
      %244 = vst.msk [vmem:[%s235 + $0xa8] sm:$0x1] %vm236, -3.4028235e+38
      %245 = vst.msk [vmem:[%s235 + $0xc0] sm:$0x1] %vm236, -3.4028235e+38
      %246 = vst.msk [vmem:[%s235 + $0xd8] sm:$0x1] %vm236, -3.4028235e+38
      %247 = vst.msk [vmem:[%s235 + $0xf0] sm:$0x1] %vm236, -3.4028235e+38
      %248 = vst.msk [vmem:[%s235 + $0x108] sm:$0x1] %vm236, -3.4028235e+38
      %249 = vst.msk [vmem:[%s235 + $0x120] sm:$0x1] %vm236, -3.4028235e+38
      %250 = vst.msk [vmem:[%s235 + $0x138] sm:$0x1] %vm236, -3.4028235e+38
      %251 = vst.msk [vmem:[%s235 + $0x150] sm:$0x1] %vm236, -3.4028235e+38
      %252 = vst.msk [vmem:[%s235 + $0x168] sm:$0x1] %vm236, -3.4028235e+38
      %253 = vst.msk [vmem:[%s235 + $0x11] sm:$0x1] %vm236, -3.4028235e+38
      %254 = vst.msk [vmem:[%s235 + $0x29] sm:$0x1] %vm236, -3.4028235e+38
      %255 = vst.msk [vmem:[%s235 + $0x41] sm:$0x1] %vm236, -3.4028235e+38
      %256 = vst.msk [vmem:[%s235 + $0x59] sm:$0x1] %vm236, -3.4028235e+38
      %257 = vst.msk [vmem:[%s235 + $0x71] sm:$0x1] %vm236, -3.4028235e+38
      %258 = vst.msk [vmem:[%s235 + $0x89] sm:$0x1] %vm236, -3.4028235e+38
      %259 = vst.msk [vmem:[%s235 + $0xa1] sm:$0x1] %vm236, -3.4028235e+38
      %260 = vst.msk [vmem:[%s235 + $0xb9] sm:$0x1] %vm236, -3.4028235e+38
      %261 = vst.msk [vmem:[%s235 + $0xd1] sm:$0x1] %vm236, -3.4028235e+38
      %262 = vst.msk [vmem:[%s235 + $0xe9] sm:$0x1] %vm236, -3.4028235e+38
      %263 = vst.msk [vmem:[%s235 + $0x101] sm:$0x1] %vm236, -3.4028235e+38
      %264 = vst.msk [vmem:[%s235 + $0x119] sm:$0x1] %vm236, -3.4028235e+38
      %265 = vst.msk [vmem:[%s235 + $0x131] sm:$0x1] %vm236, -3.4028235e+38
      %266 = vst.msk [vmem:[%s235 + $0x149] sm:$0x1] %vm236, -3.4028235e+38
      %267 = vst.msk [vmem:[%s235 + $0x161] sm:$0x1] %vm236, -3.4028235e+38
      %268 = vst.msk [vmem:[%s235 + $0x179] sm:$0x1] %vm236, -3.4028235e+38
      %v269 = vld [vmem:[%s219] sm:$0xf]
      %v270 = vld [vmem:[%s219 + $0x4] sm:$0xf]
      %v271 = vld [vmem:[%s219 + $0x8] sm:$0xf]
      %v272 = vld [vmem:[%s219 + $0xc] sm:$0xf]
      %v273 = vld [vmem:[%s219 + $0x10] sm:$0xf]
      %v274 = vld [vmem:[%s219 + $0x14] sm:$0xf]
      %v275 = vld [vmem:[%s219 + $0x18] sm:$0xf]
      %v276 = vld [vmem:[%s219 + $0x1c] sm:$0xf]
      %v277 = vld [vmem:[%s219 + $0x20] sm:$0xf]
      %v278 = vld [vmem:[%s219 + $0x24] sm:$0xf]
      %v279 = vld [vmem:[%s219 + $0x28] sm:$0xf]
      %v280 = vld [vmem:[%s219 + $0x2c] sm:$0xf]
      %v281 = vld [vmem:[%s219 + $0x30] sm:$0xf]
      %v282 = vld [vmem:[%s219 + $0x34] sm:$0xf]
      %v283 = vld [vmem:[%s219 + $0x38] sm:$0xf]
      %v284 = vld [vmem:[%s219 + $0x3c] sm:$0xf]
      %v285 = vld [vmem:[%s219 + $0x40] sm:$0xf]
      %v286 = vld [vmem:[%s219 + $0x44] sm:$0xf]
      %v287 = vld [vmem:[%s219 + $0x48] sm:$0xf]
      %v288 = vld [vmem:[%s219 + $0x4c] sm:$0xf]
      %v289 = vld [vmem:[%s219 + $0x50] sm:$0xf]
      %v290 = vld [vmem:[%s219 + $0x54] sm:$0xf]
      %v291 = vld [vmem:[%s219 + $0x58] sm:$0xf]
      %v292 = vld [vmem:[%s219 + $0x5c] sm:$0xf]
      %v293 = vld [vmem:[%s219 + $0x60] sm:$0xf]
      %v294 = vld [vmem:[%s219 + $0x64] sm:$0xf]
      %v295 = vld [vmem:[%s219 + $0x68] sm:$0xf]
      %v296 = vld [vmem:[%s219 + $0x6c] sm:$0xf]
      %v297 = vld [vmem:[%s219 + $0x70] sm:$0xf]
      %v298 = vld [vmem:[%s219 + $0x74] sm:$0xf]
      %v299 = vld [vmem:[%s219 + $0x78] sm:$0xf]
      %v300 = vld [vmem:[%s219 + $0x7c] sm:$0xf]
      %v301 = vunpack.c.l.bf16 %v269
      %v302 = vunpack.c.l.bf16 %v270
      %v303 = vunpack.c.l.bf16 %v271
      %v304 = vunpack.c.l.bf16 %v272
      %v305 = vunpack.c.l.bf16 %v273
      %v306 = vunpack.c.l.bf16 %v274
      %v307 = vunpack.c.l.bf16 %v275
      %v308 = vunpack.c.l.bf16 %v276
      %v309 = vunpack.c.l.bf16 %v277
      %v310 = vunpack.c.l.bf16 %v278
      %v311 = vunpack.c.l.bf16 %v279
      %v312 = vunpack.c.l.bf16 %v280
      %v313 = vunpack.c.l.bf16 %v281
      %v314 = vunpack.c.l.bf16 %v282
      %v315 = vunpack.c.l.bf16 %v283
      %v316 = vunpack.c.l.bf16 %v284
      %v317 = vunpack.c.l.bf16 %v285
      %v318 = vunpack.c.l.bf16 %v286
      %v319 = vunpack.c.l.bf16 %v287
      %v320 = vunpack.c.l.bf16 %v288
      %v321 = vunpack.c.l.bf16 %v289
      %v322 = vunpack.c.l.bf16 %v290
      %v323 = vunpack.c.l.bf16 %v291
      %v324 = vunpack.c.l.bf16 %v292
      %v325 = vunpack.c.l.bf16 %v293
      %v326 = vunpack.c.l.bf16 %v294
      %v327 = vunpack.c.l.bf16 %v295
      %v328 = vunpack.c.l.bf16 %v296
      %v329 = vunpack.c.l.bf16 %v297
      %v330 = vunpack.c.l.bf16 %v298
      %v331 = vunpack.c.l.bf16 %v299
      %v332 = vunpack.c.l.bf16 %v300
      %333 = vst.msk [vmem:[%s235 + $0x1] sm:$0xff] %vm226, %v301
      %334 = vst.msk [vmem:[%s235 + $0x9] sm:$0xff] %vm226, %v302
      %335 = vst.msk [vmem:[%s235 + $0x19] sm:$0xff] %vm226, %v303
      %336 = vst.msk [vmem:[%s235 + $0x21] sm:$0xff] %vm226, %v304
      %337 = vst.msk [vmem:[%s235 + $0x31] sm:$0xff] %vm226, %v305
      %338 = vst.msk [vmem:[%s235 + $0x39] sm:$0xff] %vm226, %v306
      %339 = vst.msk [vmem:[%s235 + $0x49] sm:$0xff] %vm226, %v307
      %340 = vst.msk [vmem:[%s235 + $0x51] sm:$0xff] %vm226, %v308
      %341 = vst.msk [vmem:[%s235 + $0x61] sm:$0xff] %vm226, %v309
      %342 = vst.msk [vmem:[%s235 + $0x69] sm:$0xff] %vm226, %v310
      %343 = vst.msk [vmem:[%s235 + $0x79] sm:$0xff] %vm226, %v311
      %344 = vst.msk [vmem:[%s235 + $0x81] sm:$0xff] %vm226, %v312
      %345 = vst.msk [vmem:[%s235 + $0x91] sm:$0xff] %vm226, %v313
      %346 = vst.msk [vmem:[%s235 + $0x99] sm:$0xff] %vm226, %v314
      %347 = vst.msk [vmem:[%s235 + $0xa9] sm:$0xff] %vm226, %v315
      %348 = vst.msk [vmem:[%s235 + $0xb1] sm:$0xff] %vm226, %v316
      %349 = vst.msk [vmem:[%s235 + $0xc1] sm:$0xff] %vm226, %v317
      %350 = vst.msk [vmem:[%s235 + $0xc9] sm:$0xff] %vm226, %v318
      %351 = vst.msk [vmem:[%s235 + $0xd9] sm:$0xff] %vm226, %v319
      %352 = vst.msk [vmem:[%s235 + $0xe1] sm:$0xff] %vm226, %v320
      %353 = vst.msk [vmem:[%s235 + $0xf1] sm:$0xff] %vm226, %v321
      %354 = vst.msk [vmem:[%s235 + $0xf9] sm:$0xff] %vm226, %v322
      %355 = vst.msk [vmem:[%s235 + $0x109] sm:$0xff] %vm226, %v323
      %356 = vst.msk [vmem:[%s235 + $0x111] sm:$0xff] %vm226, %v324
      %357 = vst.msk [vmem:[%s235 + $0x121] sm:$0xff] %vm226, %v325
      %358 = vst.msk [vmem:[%s235 + $0x129] sm:$0xff] %vm226, %v326
      %359 = vst.msk [vmem:[%s235 + $0x139] sm:$0xff] %vm226, %v327
      %360 = vst.msk [vmem:[%s235 + $0x141] sm:$0xff] %vm226, %v328
      %361 = vst.msk [vmem:[%s235 + $0x151] sm:$0xff] %vm226, %v329
      %362 = vst.msk [vmem:[%s235 + $0x159] sm:$0xff] %vm226, %v330
      %363 = vst.msk [vmem:[%s235 + $0x169] sm:$0xff] %vm226, %v331
      %364 = vst.msk [vmem:[%s235 + $0x171] sm:$0xff] %vm226, %v332
      %v365 = vld [vmem:[#allocation2] ss:$2 sm:$0xff]
      %s366 = scalar_lea.vmem [#allocation2], 24
      %v367 = vld [vmem:[%s366] ss:$2 sm:$0xff]
      %s368 = scalar_lea.vmem [#allocation2], 48
      %v369 = vld [vmem:[%s368] ss:$2 sm:$0xff]
      %s370 = scalar_lea.vmem [#allocation2], 72
      %v371 = vld [vmem:[%s370] ss:$2 sm:$0xff]
      %s372 = scalar_lea.vmem [#allocation2], 96
      %v373 = vld [vmem:[%s372] ss:$2 sm:$0xff]
      %s374 = scalar_lea.vmem [#allocation2], 120
      %v375 = vld [vmem:[%s374] ss:$2 sm:$0xff]
      %s376 = scalar_lea.vmem [#allocation2], 144
      %v377 = vld [vmem:[%s376] ss:$2 sm:$0xff]
      %s378 = scalar_lea.vmem [#allocation2], 168
      %v379 = vld [vmem:[%s378] ss:$2 sm:$0xff]
      %s380 = scalar_lea.vmem [#allocation2], 192
      %v381 = vld [vmem:[%s380] ss:$2 sm:$0xff]
      %s382 = scalar_lea.vmem [#allocation2], 216
      %v383 = vld [vmem:[%s382] ss:$2 sm:$0xff]
      %s384 = scalar_lea.vmem [#allocation2], 240
      %v385 = vld [vmem:[%s384] ss:$2 sm:$0xff]
      %s386 = scalar_lea.vmem [#allocation2], 264
      %v387 = vld [vmem:[%s386] ss:$2 sm:$0xff]
      %s388 = scalar_lea.vmem [#allocation2], 288
      %v389 = vld [vmem:[%s388] ss:$2 sm:$0xff]
      %s390 = scalar_lea.vmem [#allocation2], 312
      %v391 = vld [vmem:[%s390] ss:$2 sm:$0xff]
      %s392 = scalar_lea.vmem [#allocation2], 336
      %v393 = vld [vmem:[%s392] ss:$2 sm:$0xff]
      %s394 = scalar_lea.vmem [#allocation2], 360
      %v395 = vld [vmem:[%s394] ss:$2 sm:$0xff]
      %s396 = scalar_lea.vmem [#allocation2], 384
      %v397 = vld [vmem:[%s396] ss:$2 sm:$0xff]
      %s398 = scalar_lea.vmem [#allocation2], 1
      %v399 = vld [vmem:[%s398] ss:$2 sm:$0xff]
      %s400 = scalar_lea.vmem [#allocation2], 25
      %v401 = vld [vmem:[%s400] ss:$2 sm:$0xff]
      %s402 = scalar_lea.vmem [#allocation2], 49
      %v403 = vld [vmem:[%s402] ss:$2 sm:$0xff]
      %s404 = scalar_lea.vmem [#allocation2], 73
      %v405 = vld [vmem:[%s404] ss:$2 sm:$0xff]
      %s406 = scalar_lea.vmem [#allocation2], 97
      %v407 = vld [vmem:[%s406] ss:$2 sm:$0xff]
      %s408 = scalar_lea.vmem [#allocation2], 121
      %v409 = vld [vmem:[%s408] ss:$2 sm:$0xff]
      %s410 = scalar_lea.vmem [#allocation2], 145
      %v411 = vld [vmem:[%s410] ss:$2 sm:$0xff]
      %s412 = scalar_lea.vmem [#allocation2], 169
      %v413 = vld [vmem:[%s412] ss:$2 sm:$0xff]
      %s414 = scalar_lea.vmem [#allocation2], 193
      %v415 = vld [vmem:[%s414] ss:$2 sm:$0xff]
      %s416 = scalar_lea.vmem [#allocation2], 217
      %v417 = vld [vmem:[%s416] ss:$2 sm:$0xff]
      %s418 = scalar_lea.vmem [#allocation2], 241
      %v419 = vld [vmem:[%s418] ss:$2 sm:$0xff]
      %s420 = scalar_lea.vmem [#allocation2], 265
      %v421 = vld [vmem:[%s420] ss:$2 sm:$0xff]
      %s422 = scalar_lea.vmem [#allocation2], 289
      %v423 = vld [vmem:[%s422] ss:$2 sm:$0xff]
      %s424 = scalar_lea.vmem [#allocation2], 313
      %v425 = vld [vmem:[%s424] ss:$2 sm:$0xff]
      %s426 = scalar_lea.vmem [#allocation2], 337
      %v427 = vld [vmem:[%s426] ss:$2 sm:$0xff]
      %s428 = scalar_lea.vmem [#allocation2], 361
      %v429 = vld [vmem:[%s428] ss:$2 sm:$0xff]
      %s430 = scalar_lea.vmem [#allocation2], 385
      %v431 = vld [vmem:[%s430] ss:$2 sm:$0xff]
      %s432 = scalar_lea.vmem [#allocation2], 2
      %v433 = vld [vmem:[%s432] ss:$2 sm:$0xff]
      %s434 = scalar_lea.vmem [#allocation2], 26
      %v435 = vld [vmem:[%s434] ss:$2 sm:$0xff]
      %s436 = scalar_lea.vmem [#allocation2], 50
      %v437 = vld [vmem:[%s436] ss:$2 sm:$0xff]
      %s438 = scalar_lea.vmem [#allocation2], 74
      %v439 = vld [vmem:[%s438] ss:$2 sm:$0xff]
      %s440 = scalar_lea.vmem [#allocation2], 98
      %v441 = vld [vmem:[%s440] ss:$2 sm:$0xff]
      %s442 = scalar_lea.vmem [#allocation2], 122
      %v443 = vld [vmem:[%s442] ss:$2 sm:$0xff]
      %s444 = scalar_lea.vmem [#allocation2], 146
      %v445 = vld [vmem:[%s444] ss:$2 sm:$0xff]
      %s446 = scalar_lea.vmem [#allocation2], 170
      %v447 = vld [vmem:[%s446] ss:$2 sm:$0xff]
      %s448 = scalar_lea.vmem [#allocation2], 194
      %v449 = vld [vmem:[%s448] ss:$2 sm:$0xff]
      %s450 = scalar_lea.vmem [#allocation2], 218
      %v451 = vld [vmem:[%s450] ss:$2 sm:$0xff]
      %s452 = scalar_lea.vmem [#allocation2], 242
      %v453 = vld [vmem:[%s452] ss:$2 sm:$0xff]
      %s454 = scalar_lea.vmem [#allocation2], 266
      %v455 = vld [vmem:[%s454] ss:$2 sm:$0xff]
      %s456 = scalar_lea.vmem [#allocation2], 290
      %v457 = vld [vmem:[%s456] ss:$2 sm:$0xff]
      %s458 = scalar_lea.vmem [#allocation2], 314
      %v459 = vld [vmem:[%s458] ss:$2 sm:$0xff]
      %s460 = scalar_lea.vmem [#allocation2], 338
      %v461 = vld [vmem:[%s460] ss:$2 sm:$0xff]
      %s462 = scalar_lea.vmem [#allocation2], 362
      %v463 = vld [vmem:[%s462] ss:$2 sm:$0xff]
      %s464 = scalar_lea.vmem [#allocation2], 386
      %v465 = vld [vmem:[%s464] ss:$2 sm:$0xff]
      %v466 = vmax.f32 %v365, %v399
      %v467 = vmax.f32 %v367, %v401
      %v468 = vmax.f32 %v369, %v403
      %v469 = vmax.f32 %v371, %v405
      %v470 = vmax.f32 %v373, %v407
      %v471 = vmax.f32 %v375, %v409
      %v472 = vmax.f32 %v377, %v411
      %v473 = vmax.f32 %v379, %v413
      %v474 = vmax.f32 %v381, %v415
      %v475 = vmax.f32 %v383, %v417
      %v476 = vmax.f32 %v385, %v419
      %v477 = vmax.f32 %v387, %v421
      %v478 = vmax.f32 %v389, %v423
      %v479 = vmax.f32 %v391, %v425
      %v480 = vmax.f32 %v393, %v427
      %v481 = vmax.f32 %v395, %v429
      %v482 = vmax.f32 %v397, %v431
      %v483 = vmax.f32 %v466, %v433
      %v484 = vmax.f32 %v467, %v435
      %v485 = vmax.f32 %v468, %v437
      %v486 = vmax.f32 %v469, %v439
      %v487 = vmax.f32 %v470, %v441
      %v488 = vmax.f32 %v471, %v443
      %v489 = vmax.f32 %v472, %v445
      %v490 = vmax.f32 %v473, %v447
      %v491 = vmax.f32 %v474, %v449
      %v492 = vmax.f32 %v475, %v451
      %v493 = vmax.f32 %v476, %v453
      %v494 = vmax.f32 %v477, %v455
      %v495 = vmax.f32 %v478, %v457
      %v496 = vmax.f32 %v479, %v459
      %v497 = vmax.f32 %v480, %v461
      %v498 = vmax.f32 %v481, %v463
      %v499 = vmax.f32 %v482, %v465
      %v500 = vmax.f32 %v483, %v484
      %v501 = vmax.f32 %v485, %v486
      %v502 = vmax.f32 %v487, %v488
      %v503 = vmax.f32 %v489, %v490
      %v504 = vmax.f32 %v491, %v492
      %v505 = vmax.f32 %v493, %v494
      %v506 = vmax.f32 %v495, %v496
      %v507 = vmax.f32 %v497, %v498
      %v508 = vmax.f32 %v500, %v485
      %v509 = vmax.f32 %v501, %v487
      %v510 = vmax.f32 %v502, %v489
      %v511 = vmax.f32 %v503, %v491
      %v512 = vmax.f32 %v504, %v493
      %v513 = vmax.f32 %v505, %v495
      %v514 = vmax.f32 %v506, %v497
      %v515 = vmax.f32 %v507, %v499
      %v516 = vpack.c.bf16 %v509, %v508
      %v517 = vpack.c.bf16 %v511, %v510
      %v518 = vpack.c.bf16 %v513, %v512
      %v519 = vpack.c.bf16 %v515, %v514
      %v520 = vld [vmem:[%s1] sm:$0xf]
      %v521 = vld [vmem:[%s1 + $0x4] sm:$0xf]
      %v522 = vld [vmem:[%s1 + $0x8] sm:$0xf]
      %v523 = vld [vmem:[%s1 + $0xc] sm:$0xf]
      %v524 = vld [vmem:[%s2] sm:$0x1]
      %v526 = vlaneseq
      %v527 = vshrl.u32 %v526, 7
      %v528 = vsub.s32 0, %v527
      %v529 = vrot.slane %v524, %v528
      %v535 = vunpack.c.l.b16 %v520
      %v536 = vunpack.c.l.b16 %v521
      %v537 = vunpack.c.l.b16 %v522
      %v538 = vunpack.c.l.b16 %v523
      %v539 = vpack.c.b16 %v536, %v535
      %v540 = vpack.c.b16 %v538, %v537
      %v544 = vsel %vm226, %v516, 0
      %v547 = vsel %vm226, %v517, 0
      %v550 = vsel %vm226, %v518, 0
      %v553 = vsel %vm226, %v519, 0
      %555 = vmatprep.subr.bf16.mxu0 0
      %556 = vmatpush1.bf16.msra.mxu0 0
      %557 = vmatprep.subr.bf16.mxu0 0
      %558 = vmatpush1.bf16.msra.mxu0 0
      %559 = vmatprep.subr.bf16.mxu0 0
      %560 = vmatpush1.bf16.msra.mxu0 0
      %561 = vmatprep.subr.bf16.mxu0 0
      %562 = vmatpush1.bf16.msra.mxu0 0
      %563 = vmatprep.subr.bf16.mxu0 0
      %564 = vmatpush1.bf16.msra.mxu0 0
      %565 = vmatprep.subr.bf16.mxu0 0
      %566 = vmatpush1.bf16.msra.mxu0 0
      %567 = vmatprep.subr.bf16.mxu0 0
      %568 = vmatpush1.bf16.msra.mxu0 %v540
      %569 = vmatprep.subr.bf16.mxu0 0
      %570 = vmatpush1.bf16.msra.mxu0 %v539
      %571 = vmatprep.subr.bf16.mxu0 0
      %572 = vmatpush2.bf16.msra.mxu0 0
      %573 = vmatprep.subr.bf16.mxu0 0
      %574 = vmatpush2.bf16.msra.mxu0 0
      %575 = vmatprep.subr.bf16.mxu0 0
      %576 = vmatpush2.bf16.msra.mxu0 0
      %577 = vmatprep.subr.bf16.mxu0 0
      %578 = vmatpush2.bf16.msra.mxu0 0
      %579 = vmatprep.subr.bf16.mxu0 0
      %580 = vmatpush2.bf16.msra.mxu0 0
      %581 = vmatprep.subr.bf16.mxu0 0
      %582 = vmatpush2.bf16.msra.mxu0 0
      %583 = vmatprep.subr.bf16.mxu0 0
      %584 = vmatpush2.bf16.msra.mxu0 0
      %585 = vmatprep.subr.bf16.mxu0 0
      %586 = vmatpush2.bf16.msra.mxu0 0
      %587 = vmatprep.mubr.bf16.mxu0 0
      %588 = vmatmul.mubr.bf16.gmra.mxu0 %v544
      %v589 = vpop.f32.mrf.mxu0
      %v590 = vadd.f32 %v529, %v589
      %v591 = vpop.f32.mrf.mxu0
      %v592 = vpop.f32.mrf.mxu0
      %v593 = vadd.f32 %v529, %v592
      %v594 = vpop.f32.mrf.mxu0
      %595 = vmatprep.mubr.bf16.mxu0 0
      %596 = vmatmul.mubr.bf16.gmra.mxu0 %v547
      %v597 = vpop.f32.mrf.mxu0
      %v598 = vadd.f32 %v529, %v597
      %v599 = vpop.f32.mrf.mxu0
      %v600 = vpop.f32.mrf.mxu0
      %v601 = vadd.f32 %v529, %v600
      %v602 = vpop.f32.mrf.mxu0
      %603 = vmatprep.mubr.bf16.mxu0 0
      %604 = vmatmul.mubr.bf16.gmra.mxu0 %v550
      %v605 = vpop.f32.mrf.mxu0
      %v606 = vadd.f32 %v529, %v605
      %v607 = vpop.f32.mrf.mxu0
      %v608 = vpop.f32.mrf.mxu0
      %v609 = vadd.f32 %v529, %v608
      %v610 = vpop.f32.mrf.mxu0
      %611 = vmatprep.mubr.bf16.mxu0 0
      %612 = vmatmul.mubr.bf16.gmra.mxu0 %v553
      %v613 = vpop.f32.mrf.mxu0
      %v614 = vadd.f32 %v529, %v613
      %v615 = vpop.f32.mrf.mxu0
      %v616 = vpop.f32.mrf.mxu0
      %v617 = vadd.f32 %v529, %v616
      %v618 = vpop.f32.mrf.mxu0
      %619 = vdwg.mxu0
      %v620 = vpack.c.bf16 %v593, %v590
      %v621 = vpack.c.bf16 %v601, %v598
      %v622 = vpack.c.bf16 %v609, %v606
      %v623 = vpack.c.bf16 %v617, %v614
      %v624 = vld [vmem:[%s3] sm:$0xf]
      %v625 = vld [vmem:[%s3 + $0x4] sm:$0xf]
      %v626 = vld [vmem:[%s3 + $0x8] sm:$0xf]
      %v627 = vld [vmem:[%s3 + $0xc] sm:$0xf]
      %v628 = vld [vmem:[%s3 + $0x10] sm:$0xf]
      %v629 = vld [vmem:[%s3 + $0x14] sm:$0xf]
      %v630 = vld [vmem:[%s3 + $0x18] sm:$0xf]
      %v631 = vld [vmem:[%s3 + $0x1c] sm:$0xf]
      %v632 = vld [vmem:[%s3 + $0x20] sm:$0xf]
      %v633 = vld [vmem:[%s3 + $0x24] sm:$0xf]
      %v634 = vld [vmem:[%s3 + $0x28] sm:$0xf]
      %v635 = vld [vmem:[%s3 + $0x2c] sm:$0xf]
      %v636 = vld [vmem:[%s3 + $0x30] sm:$0xf]
      %v637 = vld [vmem:[%s3 + $0x34] sm:$0xf]
      %v638 = vld [vmem:[%s3 + $0x38] sm:$0xf]
      %v639 = vld [vmem:[%s3 + $0x3c] sm:$0xf]
      %v640 = vld [vmem:[%s4] sm:$0x1]
      %v642 = vlaneseq
      %v643 = vshrl.u32 %v642, 7
      %v644 = vsub.s32 0, %v643
      %v645 = vrot.slane %v640, %v644
      %v663 = vunpack.c.l.b16 %v624
      %v664 = vunpack.c.l.b16 %v625
      %v665 = vunpack.c.l.b16 %v626
      %v666 = vunpack.c.l.b16 %v627
      %v667 = vunpack.c.l.b16 %v628
      %v668 = vunpack.c.l.b16 %v629
      %v669 = vunpack.c.l.b16 %v630
      %v670 = vunpack.c.l.b16 %v631
      %v671 = vunpack.c.l.b16 %v632
      %v672 = vunpack.c.l.b16 %v633
      %v673 = vunpack.c.l.b16 %v634
      %v674 = vunpack.c.l.b16 %v635
      %v675 = vunpack.c.l.b16 %v636
      %v676 = vunpack.c.l.b16 %v637
      %v677 = vunpack.c.l.b16 %v638
      %v678 = vunpack.c.l.b16 %v639
      %v679 = vpack.c.b16 %v664, %v663
      %v680 = vpack.c.b16 %v666, %v665
      %v681 = vpack.c.b16 %v668, %v667
      %v682 = vpack.c.b16 %v670, %v669
      %v683 = vpack.c.b16 %v672, %v671
      %v684 = vpack.c.b16 %v674, %v673
      %v685 = vpack.c.b16 %v676, %v675
      %v686 = vpack.c.b16 %v678, %v677
      %695 = vmatprep.subr.bf16.mxu0 0
      %696 = vmatpush1.bf16.msra.mxu0 %v686
      %697 = vmatprep.subr.bf16.mxu0 0
      %698 = vmatpush1.bf16.msra.mxu0 %v685
      %699 = vmatprep.subr.bf16.mxu0 0
      %700 = vmatpush1.bf16.msra.mxu0 %v684
      %701 = vmatprep.subr.bf16.mxu0 0
      %702 = vmatpush1.bf16.msra.mxu0 %v683
      %703 = vmatprep.subr.bf16.mxu0 0
      %704 = vmatpush1.bf16.msra.mxu0 %v682
      %705 = vmatprep.subr.bf16.mxu0 0
      %706 = vmatpush1.bf16.msra.mxu0 %v681
      %707 = vmatprep.subr.bf16.mxu0 0
      %708 = vmatpush1.bf16.msra.mxu0 %v680
      %709 = vmatprep.subr.bf16.mxu0 0
      %710 = vmatpush1.bf16.msra.mxu0 %v679
      %711 = vmatprep.subr.bf16.mxu0 0
      %712 = vmatpush2.bf16.msra.mxu0 0
      %713 = vmatprep.subr.bf16.mxu0 0
      %714 = vmatpush2.bf16.msra.mxu0 0
      %715 = vmatprep.subr.bf16.mxu0 0
      %716 = vmatpush2.bf16.msra.mxu0 0
      %717 = vmatprep.subr.bf16.mxu0 0
      %718 = vmatpush2.bf16.msra.mxu0 0
      %719 = vmatprep.subr.bf16.mxu0 0
      %720 = vmatpush2.bf16.msra.mxu0 0
      %721 = vmatprep.subr.bf16.mxu0 0
      %722 = vmatpush2.bf16.msra.mxu0 0
      %723 = vmatprep.subr.bf16.mxu0 0
      %724 = vmatpush2.bf16.msra.mxu0 0
      %725 = vmatprep.subr.bf16.mxu0 0
      %726 = vmatpush2.bf16.msra.mxu0 0
      %727 = vmatprep.mubr.bf16.mxu0 0
      %728 = vmatmul.mubr.bf16.gmra.mxu0 %v620
      %v729 = vpop.f32.mrf.mxu0
      %v730 = vadd.f32 %v645, %v729
      %v731 = vpop.f32.mrf.mxu0
      %v732 = vpop.f32.mrf.mxu0
      %v733 = vadd.f32 %v645, %v732
      %v734 = vpop.f32.mrf.mxu0
      %735 = vmatprep.mubr.bf16.mxu0 0
      %736 = vmatmul.mubr.bf16.gmra.mxu0 %v621
      %v737 = vpop.f32.mrf.mxu0
      %v738 = vadd.f32 %v645, %v737
      %v739 = vpop.f32.mrf.mxu0
      %v740 = vpop.f32.mrf.mxu0
      %v741 = vadd.f32 %v645, %v740
      %v742 = vpop.f32.mrf.mxu0
      %743 = vmatprep.mubr.bf16.mxu0 0
      %744 = vmatmul.mubr.bf16.gmra.mxu0 %v622
      %v745 = vpop.f32.mrf.mxu0
      %v746 = vadd.f32 %v645, %v745
      %v747 = vpop.f32.mrf.mxu0
      %v748 = vpop.f32.mrf.mxu0
      %v749 = vadd.f32 %v645, %v748
      %v750 = vpop.f32.mrf.mxu0
      %751 = vmatprep.mubr.bf16.mxu0 0
      %752 = vmatmul.mubr.bf16.gmra.mxu0 %v623
      %v753 = vpop.f32.mrf.mxu0
      %v754 = vadd.f32 %v645, %v753
      %v755 = vpop.f32.mrf.mxu0
      %v756 = vpop.f32.mrf.mxu0
      %v757 = vadd.f32 %v645, %v756
      %v758 = vpop.f32.mrf.mxu0
      %759 = vdwg.mxu0
      %v760 = vadd.f32 %v730, %v590
      %v761 = vadd.f32 %v733, %v593
      %v762 = vadd.f32 %v738, %v598
      %v763 = vadd.f32 %v741, %v601
      %v764 = vadd.f32 %v746, %v606
      %v765 = vadd.f32 %v749, %v609
      %v766 = vadd.f32 %v754, %v614
      %v767 = vadd.f32 %v757, %v617
      %v768 = vpack.c.bf16 %v761, %v760
      %v769 = vpack.c.bf16 %v763, %v762
      %v770 = vpack.c.bf16 %v765, %v764
      %v771 = vpack.c.bf16 %v767, %v766
      %v776 = vunpack.c.l.b16 %v768
      %v777 = vunpack.c.h.b16 %v768
      %v778 = vunpack.c.l.b16 %v769
      %v779 = vunpack.c.h.b16 %v769
      %v780 = vunpack.c.l.b16 %v770
      %v781 = vunpack.c.h.b16 %v770
      %v782 = vunpack.c.l.b16 %v771
      %v783 = vunpack.c.h.b16 %v771
      %v784 = vpack.c.b16 %v776, %v776
      %v785 = vpack.c.b16 %v777, %v777
      %v786 = vpack.c.b16 %v778, %v778
      %v787 = vpack.c.b16 %v779, %v779
      %v788 = vpack.c.b16 %v780, %v780
      %v789 = vpack.c.b16 %v781, %v781
      %v790 = vpack.c.b16 %v782, %v782
      %v791 = vpack.c.b16 %v783, %v783
      %vm800 = vcmask 519168
      %801 = vst.msk [vmem:[%s224] sm:$0xf] %vm800, %v784
      %802 = vst.msk [vmem:[%s224 + $0x4] sm:$0xf] %vm800, %v785
      %803 = vst.msk [vmem:[%s224 + $0x8] sm:$0xf] %vm800, %v786
      %804 = vst.msk [vmem:[%s224 + $0xc] sm:$0xf] %vm800, %v787
      %805 = vst.msk [vmem:[%s224 + $0x10] sm:$0xf] %vm800, %v788
      %806 = vst.msk [vmem:[%s224 + $0x14] sm:$0xf] %vm800, %v789
      %807 = vst.msk [vmem:[%s224 + $0x18] sm:$0xf] %vm800, %v790
      %808 = vst.msk [vmem:[%s224 + $0x1c] sm:$0xf] %vm800, %v791
      %p809 = scmp.lt.s32.totalorder %s16, 1
      %s810 = scalar_select %p809, %s16, 1
      %s811 = smul.addr %s810, 8
      %s812 = smul.addr %s811, 4
      %s813 = scalar_lea.vmem %s5, %s812
      // Predicated region
      $region41: #{conv_head_pooling_forward.2} parent=39 // pred_check
        %p814 = pneg %p144
      $region42: #{conv_head_pooling_forward.2} parent=39 // pred_check_branch
        %816 = sbr.rel (%p814) target = $region44
      $region43: #{conv_head_pooling_forward.2} parent=39 // pred_region
        _
      $region44: #{conv_head_pooling_forward.2} parent=39 // pred_fallthru
        _
    $region40: #{conv_head_pooling_forward.2} parent=5 // pred_fallthru
      _
    %p817 = scmp.le.s32.totalorder 2, %s11
    // Predicated region
    $region45: #{conv_head_pooling_forward.2} parent=5 // pred_check
      %p818 = pneg %p817
    $region46: #{conv_head_pooling_forward.2} parent=5 // pred_check_branch
      %820 = sbr.rel (%p818) target = $region48
    $region47: #{conv_head_pooling_forward.2} parent=5 // pred_region
      %s821 = ssub.s32 %s11, 2
      // Predicated region
      $region49: #{conv_head_pooling_forward.2} parent=47 // pred_check
        %p822 = pneg %p150
      $region50: #{conv_head_pooling_forward.2} parent=47 // pred_check_branch
        %824 = sbr.rel (%p822) target = $region52
      $region51: #{conv_head_pooling_forward.2} parent=47 // pred_region
        %p825 = scmp.lt.s32.totalorder %s17, 1
        %s826 = scalar_select %p825, %s17, 1
        %s827 = smul.addr %s826, 8
        %s828 = smul.addr %s827, 4
        %s829 = scalar_lea.vmem %s5, %s828
      $region52: #{conv_head_pooling_forward.2} parent=47 // pred_fallthru
        _
    $region48: #{conv_head_pooling_forward.2} parent=5 // pred_fallthru
      _
  $region6: #{conv_head_pooling_forward.2} parent=0 // loop_footer
    %s15 = sadd.s32 1, %s11
  $region7: #{conv_head_pooling_forward.2} parent=0 // loop_footer_branch
    %10 = sbr.rel target = $region3
  $region8: #{conv_head_pooling_forward.2} parent=0 // loop_exit
    _

</llo_original>
